<compile_context>
chip_gen: v7x
topology: tpu7x:2x2x1
jax: 0.10.0
libtpu: 0.0.40
codegen_flags: <defaults>
</compile_context>

<pallas_src>
import functools

import jax
import jax.numpy as jnp
from jax.experimental import pallas as pl
from jax.experimental.pallas import tpu as pltpu

_TARGET_BLOCK_BYTES = 4 * 1024 * 1024      # ~4 MiB per block
_VMEM_LIMIT_BYTES = 32 * 1024 * 1024       # 2x(in+out)x4MiB = 16 MiB, 2x headroom
_LANE_CANDIDATES = (1024, 512, 256, 128)   # lane-dense last dim, multiple of 128


def _round_up(x, n):
    return ((x + n - 1) // n) * n


def _sigmoid_to_invdepth_kernel(x_ref, o_ref, *, min_inv_depth, diff_inv_depth,
                                return_depth):
    """Elementwise: inv = min_inv + diff_inv * sigmoid; optionally depth = 1/inv."""
    x = x_ref[...]
    # Python-float scalars keep x's dtype (weak typing): bf16 stays packed bf16
    # on the FMA path (native bf16 VALU on v6e/v7x); f32 stays f32.
    inv_depth = min_inv_depth + diff_inv_depth * x
    if return_depth:
        inv_f32 = inv_depth.astype(jnp.float32)
        # EUP reciprocal (separate VLIW slot). approx=False keeps full accuracy.
        depth = pl.reciprocal(inv_f32, approx=False)
        if min_inv_depth <= 0.0:
            # inv2depth semantics: 0 -> 0 (only reachable when max_depth == inf)
            depth = jnp.where(inv_f32 == 0.0, 0.0, depth)
        o_ref[...] = depth.astype(o_ref.dtype)
    else:
        o_ref[...] = inv_depth.astype(o_ref.dtype)


@functools.partial(jax.jit, static_argnums=(1, 2, 3))
def sigmoid_to_inv_depth(sigmoid, min_depth, max_depth, return_depth=False):
    """Converts a sigmoid map (NCHW) to an inverse-depth (or depth) map."""
    min_inv_depth = float(1.0 / max_depth)
    max_inv_depth = float(1.0 / min_depth)
    diff_inv_depth = max_inv_depth - min_inv_depth

    orig_shape = sigmoid.shape
    dtype = sigmoid.dtype
    itemsize = jnp.dtype(dtype).itemsize
    total = 1
    for d in orig_shape:
        total *= int(d)

    flat = sigmoid.reshape(-1)

    # ---- lane-dense 2-D layout; zero-copy (no pad) on the common path -------
    if total < 128:
        lane, m, pad = total, 1, 0                 # tiny input: one full block
    else:
        lane = None
        for cand in _LANE_CANDIDATES:
            if total % cand == 0:
                lane = cand
                break
        if lane is None:
            # Rare ragged case (element count not a multiple of 128).
            # TODO(synk): handle the ragged tail in-kernel with a masked store
            # to make this path zero-copy as well.
            lane = 128
        padded_total = _round_up(total, lane)
        pad = padded_total - total
        m = padded_total // lane

    if pad:
        flat = jnp.pad(flat, (0, pad))

    x2d = flat.reshape(m, lane)

    # ---- block rows: ~4 MiB tiles, sublane-aligned, >=2 grid steps ----------
    row_align = 8 if itemsize >= 4 else (16 if itemsize == 2 else 32)
    br_target = max(row_align,
                    (_TARGET_BLOCK_BYTES // (lane * itemsize))
                    // row_align * row_align)
    if m < 2 * row_align:
        br = m                                     # single block == full array
    else:
        # >=2 steps lets v7x shard the stream across both TensorCores.
        half = _round_up(pl.cdiv(m, 2), row_align)
        br = min(br_target, half)
    grid = (pl.cdiv(m, br),)

    kernel = functools.partial(
        _sigmoid_to_invdepth_kernel,
        min_inv_depth=min_inv_depth,
        diff_inv_depth=diff_inv_depth,
        return_depth=return_depth,
    )

    cost = pl.CostEstimate(
        flops=(3 if return_depth else 2) * total,
        transcendentals=0,
        bytes_accessed=2 * total * itemsize,
    )

    out2d = pl.pallas_call(
        kernel,
        out_shape=jax.ShapeDtypeStruct((m, lane), dtype),
        grid_spec=pltpu.PrefetchScalarGridSpec(
            num_scalar_prefetch=0,
            grid=grid,
            in_specs=[pl.BlockSpec((br, lane), lambda i: (i, 0))],
            out_specs=pl.BlockSpec((br, lane), lambda i: (i, 0)),
        ),
        compiler_params=pltpu.CompilerParams(
            dimension_semantics=("parallel",),
            vmem_limit_bytes=_VMEM_LIMIT_BYTES,
        ),
        cost_estimate=cost,
    )(x2d)

    out_flat = out2d.reshape(-1)
    if pad:
        out_flat = out_flat[:total]
    return out_flat.reshape(orig_shape)


def _ref(x, min_depth, max_depth, return_depth):
    min_inv = 1.0 / max_depth
    diff_inv = 1.0 / min_depth - min_inv
    inv = min_inv + diff_inv * x
    return 1.0 / inv if return_depth else inv


if __name__ == "__main__":
    key = jax.random.PRNGKey(0)
    min_depth, max_depth = 0.5, 100.0

    # Main NCHW sigmoid map (small), both output modes.
    x = jax.nn.sigmoid(jax.random.normal(key, (2, 4, 16, 16), dtype=jnp.float32))

    inv = sigmoid_to_inv_depth(x, min_depth, max_depth, False)
    jax.block_until_ready(inv)
    assert jnp.allclose(inv, _ref(x, min_depth, max_depth, False),
                        rtol=1e-6, atol=1e-6)

    depth = sigmoid_to_inv_depth(x, min_depth, max_depth, True)
    jax.block_until_ready(depth)
    assert jnp.allclose(depth, _ref(x, min_depth, max_depth, True),
                        rtol=1e-5, atol=1e-5)

    # Multi-step tiled path (ragged last row-block, no padding needed).
    k2 = jax.random.PRNGKey(1)
    x2 = jax.nn.sigmoid(jax.random.normal(k2, (2, 1, 192, 96), dtype=jnp.float32))
    inv2 = sigmoid_to_inv_depth(x2, min_depth, max_depth, False)
    jax.block_until_ready(inv2)
    assert jnp.allclose(inv2, _ref(x2, min_depth, max_depth, False),
                        rtol=1e-6, atol=1e-6)

    # Rare non-multiple-of-128 path (pad fallback) + tiny-input path.
    k3 = jax.random.PRNGKey(2)
    x3 = jax.nn.sigmoid(jax.random.normal(k3, (1, 1, 10, 13), dtype=jnp.float32))
    inv3 = sigmoid_to_inv_depth(x3, min_depth, max_depth, False)
    jax.block_until_ready(inv3)
    assert jnp.allclose(inv3, _ref(x3, min_depth, max_depth, False),
                        rtol=1e-6, atol=1e-6)

    print("KERNEL_OK")
</pallas_src>

<mosaic_0001>
module attributes {stable_mosaic.version = 11 : i64} {
  func.func @_sigmoid_to_invdepth_kernel(%arg0: i32, %arg1: memref<2x1024xf32, #tpu.memory_space<vmem>>, %arg2: memref<2x1024xf32, #tpu.memory_space<vmem>>) attributes {dimension_semantics = [#tpu.dimension_semantics<parallel>], iteration_bounds = array<i64: 1>, scalar_prefetch = 0 : i64, scratch_operands = 0 : i64, tpu.core_type = #tpu.core_type<tc>, window_params = [{transform_indices = @transform_0, window_bounds = array<i64: 2, 1024>}, {transform_indices = @transform_1, window_bounds = array<i64: 2, 1024>}]} {
    %c0 = arith.constant 0 : index
    %c0_0 = arith.constant 0 : index
    %0 = vector.load %arg1[%c0, %c0_0] : memref<2x1024xf32, #tpu.memory_space<vmem>>, vector<2x1024xf32>
    %cst = arith.constant 1.990000e+00 : f32
    %1 = vector.broadcast %cst : f32 to vector<2x1024xf32>
    %2 = arith.mulf %1, %0 : vector<2x1024xf32>
    %cst_1 = arith.constant 0.00999999977 : f32
    %3 = vector.broadcast %cst_1 : f32 to vector<2x1024xf32>
    %4 = arith.addf %3, %2 : vector<2x1024xf32>
    %c0_2 = arith.constant 0 : index
    %c0_3 = arith.constant 0 : index
    %5 = vector.load %arg2[%c0_2, %c0_3] : memref<2x1024xf32, #tpu.memory_space<vmem>>, vector<2x1024xf32>
    tpu.vector_store %arg2[%c0_2, %c0_3], %4 {strides = array<i32>} : memref<2x1024xf32, #tpu.memory_space<vmem>>, vector<2x1024xf32>,
    return
  }
  func.func @transform_0(%arg0: i32) -> (i32, i32) {
    %c0_i32 = arith.constant 0 : i32
    %c0_i32_0 = arith.constant 0 : i32
    return %arg0, %c0_i32 : i32, i32
  }
  func.func @transform_1(%arg0: i32) -> (i32, i32) {
    %c0_i32 = arith.constant 0 : i32
    %c0_i32_0 = arith.constant 0 : i32
    return %arg0, %c0_i32 : i32, i32
  }
}

</mosaic_0001>

<llo_original>
// kernel: sigmoid_to_inv_depth.1
$region0: #{sigmoid_to_inv_depth.1}
  #allocation0 [shape = 'u32[]', space=smem, size = 0x4, offset = 0x4, fixed_abs, tag = 'smem constant byte address 0x4 - core index']
  #allocation1 [shape = 'u32[144,128]{1,0:T(1,128)}', space=vmem, size = 0x12000, scoped, tag = 'internal scratch']
  %s0 = inlined_call_operand.vmem [shape: f32[2,1024], index: 0, kind: input, shape index: {}]
  %s1 = inlined_call_operand.vmem [shape: f32[2,1024], index: 1, kind: output, shape index: {}]
  %s2 = sld [smem:[#allocation0]]
  $region14: #{sigmoid_to_inv_depth.1} parent=0
    _
  %s4 = ssub.s32 1, %s2
  %s5 = scalar_select 0, %s4, %s2
  // Predicated region
  $region2: #{sigmoid_to_inv_depth.1} parent=0 // pred_check
    _
  $region3: #{sigmoid_to_inv_depth.1} parent=0 // pred_check_branch
    %7 = sbr.rel (0) target = $region5
  $region4: #{sigmoid_to_inv_depth.1} parent=0 // pred_region
    _
  $region5: #{sigmoid_to_inv_depth.1} parent=0 // pred_fallthru
    _
  %v8 = vld [vmem:[%s0] sm:$0xff]
  %v9 = vld [vmem:[%s0 + $0x8] sm:$0xff]
  %v10 = vmul.f32 %v8, 1.99
  %v11 = vmul.f32 %v9, 1.99
  %v12 = vadd.f32 %v10, 0.01
  %v13 = vadd.f32 %v11, 0.01
  %14 = vst [vmem:[%s1] sm:$0xff] %v12
  %15 = vst [vmem:[%s1 + $0x8] sm:$0xff] %v13
  // Predicated region
  $region6: #{sigmoid_to_inv_depth.1} parent=0 // pred_check
    _
  $region7: #{sigmoid_to_inv_depth.1} parent=0 // pred_check_branch
    %17 = sbr.rel (0) target = $region9
  $region8: #{sigmoid_to_inv_depth.1} parent=0 // pred_region
    _
  $region9: #{sigmoid_to_inv_depth.1} parent=0 // pred_fallthru
    _
  // Predicated region
  $region10: #{sigmoid_to_inv_depth.1} parent=0 // pred_check
    _
  $region11: #{sigmoid_to_inv_depth.1} parent=0 // pred_check_branch
    %19 = sbr.rel (0) target = $region13
  $region12: #{sigmoid_to_inv_depth.1} parent=0 // pred_region
    _
  $region13: #{sigmoid_to_inv_depth.1} parent=0 // pred_fallthru
    _

</llo_original>
